<compile_context>
chip_gen: v7x
topology: tpu7x:2x2x1
jax: 0.10.0
libtpu: 0.0.40
codegen_flags: <defaults>
</compile_context>

<pallas_src>
import functools

import jax
import jax.numpy as jnp
from jax.experimental import pallas as pl
from jax.experimental.pallas import tpu as pltpu

H1, H2 = 200, 100            # logical hidden sizes (match the PyTorch module)
H1_PAD, H2_PAD = 256, 128    # lane-aligned hidden sizes used inside the kernel


def _round_up(n, m):
    return (n + m - 1) // m * m


def _mlp_kernel(x_ref, w1_ref, b1_ref, w2_ref, b2_ref, w3_ref, b3_ref, o_ref):
    # One batch tile of the 3-layer MLP. x arrives f32 and is cast to bf16 on
    # the VPU so the MXU runs native bf16 with f32 accumulation; the
    # bias-add / ReLU epilogue stays in f32 (v5e VPU has no bf16 path).
    x = x_ref[...].astype(jnp.bfloat16)                                   # [TB, IN]
    h1 = jnp.dot(x, w1_ref[...], preferred_element_type=jnp.float32)      # [TB, 256]
    h1 = jnp.maximum(h1 + b1_ref[...], 0.0)
    h2 = jnp.dot(h1.astype(jnp.bfloat16), w2_ref[...],
                 preferred_element_type=jnp.float32)                      # [TB, 128]
    h2 = jnp.maximum(h2 + b2_ref[...], 0.0)
    o = jnp.dot(h2.astype(jnp.bfloat16), w3_ref[...],
                preferred_element_type=jnp.float32)                       # [TB, OUT_PAD]
    o_ref[...] = (o + b3_ref[...]).astype(o_ref.dtype)


@functools.partial(jax.jit, static_argnames=("num_outputs", "batch_tile"))
def net_forward(x, kp, *, num_outputs, batch_tile=512):
    """x: [B, num_inputs] f32. kp: prepared (lane-padded, bf16-weight) params."""
    B, num_inputs = x.shape
    out_pad = kp["w3"].shape[1]

    # Adaptive batch tiling:
    #   B <= batch_tile : one full-extent tile (<= 7 rows of padding).
    #   B  > batch_tile : balanced tiles so padding is <= 7 rows total,
    #                     never up to a whole spare tile.
    if B <= batch_tile:
        num_tiles = 1
        tb = _round_up(B, 8)
    else:
        num_tiles = pl.cdiv(B, batch_tile)
        tb = _round_up(pl.cdiv(B, num_tiles), 8)
    b_pad = num_tiles * tb

    # Under jit this pad (when needed at all) fuses into the same executable;
    # at B=8 with tb=8 it is a no-op and x goes straight into the kernel.
    xp = x if b_pad == B else jnp.pad(x, ((0, b_pad - B), (0, 0)))

    flops = 2 * b_pad * (num_inputs * H1_PAD + H1_PAD * H2_PAD + H2_PAD * out_pad)
    bytes_accessed = (
        b_pad * num_inputs * 4                                            # x (f32)
        + (num_inputs * H1_PAD + H1_PAD * H2_PAD + H2_PAD * out_pad) * 2  # weights bf16
        + (H1_PAD + H2_PAD + out_pad) * 4                                 # biases f32
        + b_pad * out_pad * 4)                                            # output f32

    # Weights/biases: whole array as a single block with a constant block
    # index -> VMEM-resident across all grid steps (no re-DMA per step).
    resident = lambda a: pl.BlockSpec(a.shape, lambda i: (0,) * a.ndim)

    out = pl.pallas_call(
        _mlp_kernel,
        out_shape=jax.ShapeDtypeStruct((b_pad, out_pad), jnp.float32),
        grid=(num_tiles,),
        in_specs=[
            pl.BlockSpec((tb, num_inputs), lambda i: (i, 0)),   # x: tiled over batch
            resident(kp["w1"]), resident(kp["b1"]),
            resident(kp["w2"]), resident(kp["b2"]),
            resident(kp["w3"]), resident(kp["b3"]),
        ],
        out_specs=pl.BlockSpec((tb, out_pad), lambda i: (i, 0)),
        compiler_params=pltpu.CompilerParams(
            dimension_semantics=("parallel",)),                 # megacore on v7x
        cost_estimate=pl.CostEstimate(
            flops=flops, transcendentals=0, bytes_accessed=bytes_accessed),
    )(xp, kp["w1"], kp["b1"], kp["w2"], kp["b2"], kp["w3"], kp["b3"])

    return out[:B, :num_outputs]


def init_params(key, num_inputs, num_outputs):
    """Raw f32 params mirroring the PyTorch module.
    Weights ~ U(0,1) (as in .uniform_(0,1)), stored [in, out] (transpose of
    PyTorch's [out, in]); biases ~ U(-1/sqrt(fan_in), 1/sqrt(fan_in))."""
    ks = jax.random.split(key, 6)

    def bias(k, fan_in, out):
        bound = 1.0 / jnp.sqrt(jnp.float32(fan_in))
        return jax.random.uniform(k, (1, out), jnp.float32, -bound, bound)

    return {
        "w1": jax.random.uniform(ks[0], (num_inputs, H1), jnp.float32, 0.0, 1.0),
        "b1": bias(ks[1], num_inputs, H1),
        "w2": jax.random.uniform(ks[2], (H1, H2), jnp.float32, 0.0, 1.0),
        "b2": bias(ks[3], H1, H2),
        "w3": jax.random.uniform(ks[4], (H2, num_outputs), jnp.float32, 0.0, 1.0),
        "b3": bias(ks[5], H2, num_outputs),
    }


def prepare_params(p, num_inputs, num_outputs):
    """Zero-pad output feature dims to lane multiples and cast weights to bf16.
    The input feature dim of w1 stays at num_inputs (the x block uses the full
    feature extent, so no input-side padding is needed).  All padding is zero,
    so padded lanes contribute nothing to the result."""
    out_pad = _round_up(num_outputs, 128)

    def pad2(a, rows, cols):
        r, c = a.shape
        return jnp.pad(a, ((0, rows - r), (0, cols - c)))

    return {
        "w1": pad2(p["w1"], num_inputs, H1_PAD).astype(jnp.bfloat16),
        "b1": pad2(p["b1"], 1, H1_PAD),                      # f32 (epilogue dtype)
        "w2": pad2(p["w2"], H1_PAD, H2_PAD).astype(jnp.bfloat16),
        "b2": pad2(p["b2"], 1, H2_PAD),
        "w3": pad2(p["w3"], H2_PAD, out_pad).astype(jnp.bfloat16),
        "b3": pad2(p["b3"], 1, out_pad),
    }


def net_forward_ref(x, p):
    h1 = jnp.maximum(x @ p["w1"] + p["b1"], 0.0)
    h2 = jnp.maximum(h1 @ p["w2"] + p["b2"], 0.0)
    return h2 @ p["w3"] + p["b3"]


if __name__ == "__main__":
    B, num_inputs, num_outputs = 8, 32, 16

    key = jax.random.PRNGKey(0)
    k_params, k_x = jax.random.split(key)
    params = init_params(k_params, num_inputs, num_outputs)
    kparams = prepare_params(params, num_inputs, num_outputs)
    x = jax.random.normal(k_x, (B, num_inputs), dtype=jnp.float32)

    out = jax.block_until_ready(net_forward(x, kparams, num_outputs=num_outputs))
    ref = jax.block_until_ready(net_forward_ref(x, params))

    assert out.shape == (B, num_outputs), out.shape
    # bf16 MXU operands vs pure-f32 reference -> loose tolerance.
    assert jnp.allclose(out, ref, rtol=2e-2, atol=1e-1), \
        float(jnp.max(jnp.abs(out - ref)))

    print("KERNEL_OK")
</pallas_src>

<mosaic_0001>
module attributes {stable_mosaic.version = 11 : i64} {
  func.func @_mlp_kernel(%arg0: i32, %arg1: memref<8x32xf32, #tpu.memory_space<vmem>>, %arg2: memref<32x256xbf16, #tpu.memory_space<vmem>>, %arg3: memref<1x256xf32, #tpu.memory_space<vmem>>, %arg4: memref<256x128xbf16, #tpu.memory_space<vmem>>, %arg5: memref<1x128xf32, #tpu.memory_space<vmem>>, %arg6: memref<128x128xbf16, #tpu.memory_space<vmem>>, %arg7: memref<1x128xf32, #tpu.memory_space<vmem>>, %arg8: memref<8x128xf32, #tpu.memory_space<vmem>>) attributes {dimension_semantics = [#tpu.dimension_semantics<parallel>], iteration_bounds = array<i64: 1>, scalar_prefetch = 0 : i64, scratch_operands = 0 : i64, tpu.core_type = #tpu.core_type<tc>, window_params = [{transform_indices = @transform_0, window_bounds = array<i64: 8, 32>}, {pipeline_mode = #tpu.pipeline_mode<synchronous>, transform_indices = @transform_1, window_bounds = array<i64: 32, 256>}, {pipeline_mode = #tpu.pipeline_mode<synchronous>, transform_indices = @transform_2, window_bounds = array<i64: 1, 256>}, {pipeline_mode = #tpu.pipeline_mode<synchronous>, transform_indices = @transform_3, window_bounds = array<i64: 256, 128>}, {pipeline_mode = #tpu.pipeline_mode<synchronous>, transform_indices = @transform_4, window_bounds = array<i64: 1, 128>}, {pipeline_mode = #tpu.pipeline_mode<synchronous>, transform_indices = @transform_5, window_bounds = array<i64: 128, 128>}, {pipeline_mode = #tpu.pipeline_mode<synchronous>, transform_indices = @transform_6, window_bounds = array<i64: 1, 128>}, {transform_indices = @transform_7, window_bounds = array<i64: 8, 128>}]} {
    %c0 = arith.constant 0 : index
    %c0_0 = arith.constant 0 : index
    %0 = vector.load %arg1[%c0, %c0_0] : memref<8x32xf32, #tpu.memory_space<vmem>>, vector<8x32xf32>
    %1 = arith.truncf %0 : vector<8x32xf32> to vector<8x32xbf16>
    %c0_1 = arith.constant 0 : index
    %c0_2 = arith.constant 0 : index
    %2 = vector.load %arg2[%c0_1, %c0_2] : memref<32x256xbf16, #tpu.memory_space<vmem>>, vector<32x256xbf16>
    %cst = arith.constant dense<0.000000e+00> : vector<8x256xf32>
    %3 = tpu.matmul %1, %2, %cst {dimension_numbers = #tpu.dot_dimension_numbers<[1], [0], [0], [1], [0, 0, 1, 1], [], []>} : vector<8x32xbf16>, vector<32x256xbf16>, vector<8x256xf32> -> vector<8x256xf32>
    %c0_3 = arith.constant 0 : index
    %c0_4 = arith.constant 0 : index
    %4 = vector.load %arg3[%c0_3, %c0_4] : memref<1x256xf32, #tpu.memory_space<vmem>>, vector<1x256xf32>
    %5 = vector.broadcast %4 : vector<1x256xf32> to vector<8x256xf32>
    %6 = arith.addf %3, %5 : vector<8x256xf32>
    %cst_5 = arith.constant 0.000000e+00 : f32
    %7 = vector.broadcast %cst_5 : f32 to vector<8x256xf32>
    %8 = arith.maximumf %6, %7 : vector<8x256xf32>
    %9 = arith.truncf %8 : vector<8x256xf32> to vector<8x256xbf16>
    %c0_6 = arith.constant 0 : index
    %c0_7 = arith.constant 0 : index
    %10 = vector.load %arg4[%c0_6, %c0_7] : memref<256x128xbf16, #tpu.memory_space<vmem>>, vector<256x128xbf16>
    %cst_8 = arith.constant dense<0.000000e+00> : vector<8x128xf32>
    %11 = tpu.matmul %9, %10, %cst_8 {dimension_numbers = #tpu.dot_dimension_numbers<[1], [0], [0], [1], [0, 0, 1, 1], [], []>} : vector<8x256xbf16>, vector<256x128xbf16>, vector<8x128xf32> -> vector<8x128xf32>
    %c0_9 = arith.constant 0 : index
    %c0_10 = arith.constant 0 : index
    %12 = vector.load %arg5[%c0_9, %c0_10] : memref<1x128xf32, #tpu.memory_space<vmem>>, vector<1x128xf32>
    %13 = vector.broadcast %12 : vector<1x128xf32> to vector<8x128xf32>
    %14 = arith.addf %11, %13 : vector<8x128xf32>
    %cst_11 = arith.constant 0.000000e+00 : f32
    %15 = vector.broadcast %cst_11 : f32 to vector<8x128xf32>
    %16 = arith.maximumf %14, %15 : vector<8x128xf32>
    %17 = arith.truncf %16 : vector<8x128xf32> to vector<8x128xbf16>
    %c0_12 = arith.constant 0 : index
    %c0_13 = arith.constant 0 : index
    %18 = vector.load %arg6[%c0_12, %c0_13] : memref<128x128xbf16, #tpu.memory_space<vmem>>, vector<128x128xbf16>
    %cst_14 = arith.constant dense<0.000000e+00> : vector<8x128xf32>
    %19 = tpu.matmul %17, %18, %cst_14 {dimension_numbers = #tpu.dot_dimension_numbers<[1], [0], [0], [1], [0, 0, 1, 1], [], []>} : vector<8x128xbf16>, vector<128x128xbf16>, vector<8x128xf32> -> vector<8x128xf32>
    %c0_15 = arith.constant 0 : index
    %c0_16 = arith.constant 0 : index
    %20 = vector.load %arg7[%c0_15, %c0_16] : memref<1x128xf32, #tpu.memory_space<vmem>>, vector<1x128xf32>
    %21 = vector.broadcast %20 : vector<1x128xf32> to vector<8x128xf32>
    %22 = arith.addf %19, %21 : vector<8x128xf32>
    %c0_17 = arith.constant 0 : index
    %c0_18 = arith.constant 0 : index
    %23 = vector.load %arg8[%c0_17, %c0_18] : memref<8x128xf32, #tpu.memory_space<vmem>>, vector<8x128xf32>
    tpu.vector_store %arg8[%c0_17, %c0_18], %22 {strides = array<i32>} : memref<8x128xf32, #tpu.memory_space<vmem>>, vector<8x128xf32>,
    return
  }
  func.func @transform_0(%arg0: i32) -> (i32, i32) {
    %c0_i32 = arith.constant 0 : i32
    %c0_i32_0 = arith.constant 0 : i32
    return %arg0, %c0_i32 : i32, i32
  }
  func.func @transform_1(%arg0: i32) -> (i32, i32) {
    %c0_i32 = arith.constant 0 : i32
    %c0_i32_0 = arith.constant 0 : i32
    %c0_i32_1 = arith.constant 0 : i32
    return %c0_i32, %c0_i32_0 : i32, i32
  }
  func.func @transform_2(%arg0: i32) -> (i32, i32) {
    %c0_i32 = arith.constant 0 : i32
    %c0_i32_0 = arith.constant 0 : i32
    %c0_i32_1 = arith.constant 0 : i32
    return %c0_i32, %c0_i32_0 : i32, i32
  }
  func.func @transform_3(%arg0: i32) -> (i32, i32) {
    %c0_i32 = arith.constant 0 : i32
    %c0_i32_0 = arith.constant 0 : i32
    %c0_i32_1 = arith.constant 0 : i32
    return %c0_i32, %c0_i32_0 : i32, i32
  }
  func.func @transform_4(%arg0: i32) -> (i32, i32) {
    %c0_i32 = arith.constant 0 : i32
    %c0_i32_0 = arith.constant 0 : i32
    %c0_i32_1 = arith.constant 0 : i32
    return %c0_i32, %c0_i32_0 : i32, i32
  }
  func.func @transform_5(%arg0: i32) -> (i32, i32) {
    %c0_i32 = arith.constant 0 : i32
    %c0_i32_0 = arith.constant 0 : i32
    %c0_i32_1 = arith.constant 0 : i32
    return %c0_i32, %c0_i32_0 : i32, i32
  }
  func.func @transform_6(%arg0: i32) -> (i32, i32) {
    %c0_i32 = arith.constant 0 : i32
    %c0_i32_0 = arith.constant 0 : i32
    %c0_i32_1 = arith.constant 0 : i32
    return %c0_i32, %c0_i32_0 : i32, i32
  }
  func.func @transform_7(%arg0: i32) -> (i32, i32) {
    %c0_i32 = arith.constant 0 : i32
    %c0_i32_0 = arith.constant 0 : i32
    return %arg0, %c0_i32 : i32, i32
  }
}

</mosaic_0001>

<llo_original>
// kernel: net_forward.1
$region0: #{net_forward.1}
  #allocation0 [shape = 'u32[]', space=smem, size = 0x4, offset = 0x4, fixed_abs, tag = 'smem constant byte address 0x4 - core index']
  #allocation1 [shape = 'u32[144,128]{1,0:T(1,128)}', space=vmem, size = 0x12000, scoped, tag = 'internal scratch']
  %s0 = inlined_call_operand.hbm [shape: f32[8,32], index: 0, kind: input, shape index: {}]
  %s1 = inlined_call_operand.hbm [shape: bf16[32,256], index: 1, kind: input, shape index: {}]
  %s2 = inlined_call_operand.vmem [shape: f32[1,256], index: 2, kind: input, shape index: {}]
  %s3 = inlined_call_operand.hbm [shape: bf16[256,128], index: 3, kind: input, shape index: {}]
  %s4 = inlined_call_operand.vmem [shape: f32[1,128], index: 4, kind: input, shape index: {}]
  %s5 = inlined_call_operand.hbm [shape: bf16[128,128], index: 5, kind: input, shape index: {}]
  %s6 = inlined_call_operand.vmem [shape: f32[1,128], index: 6, kind: input, shape index: {}]
  %s7 = inlined_call_operand.hbm [shape: f32[8,128], index: 7, kind: output, shape index: {}]
  %s8 = sld [smem:[#allocation0]]
  $region54: #{net_forward.1} parent=0
    _
  %s10 = ssub.s32 1, %s8
  %s11 = scalar_select 0, %s10, %s8
  $region1: #{net_forward.1} parent=0
    #allocation2 [shape = 'u8[4096]{0}', space=vmem, size = 0x1000, scoped, tag = 'input window, operand 0, single buffered']
    #allocation3 [shape = 's32[1]{0}', space=sflag, size = 0x4, scoped, tag = 'scoped memory for net_forward.1']
    #allocation4 [shape = 's32[1]{0}', space=sflag, size = 0x4, scoped, tag = 'scoped memory for net_forward.1']
    #allocation5 [shape = 'u8[16384]{0}', space=vmem, size = 0x4000, scoped, tag = 'input window, operand 1, single buffered']
    #allocation6 [shape = 's32[1]{0}', space=sflag, size = 0x4, scoped, tag = 'scoped memory for net_forward.1']
    #allocation7 [shape = 'u8[65536]{0}', space=vmem, size = 0x10000, scoped, tag = 'input window, operand 3, single buffered']
    #allocation8 [shape = 'u8[32768]{0}', space=vmem, size = 0x8000, scoped, tag = 'input window, operand 5, single buffered']
    #allocation9 [shape = 's32[1]{0}', space=sflag, size = 0x4, scoped, tag = 'scoped memory for net_forward.1']
    #allocation10 [shape = 'u8[4096]{0}', space=vmem, size = 0x1000, scoped, tag = 'output window, operand 0, single buffered']
    %12 = vsyncpa [#allocation3], 0
    %13 = vsyncpa [#allocation6], 0
    %14 = vsyncpa [#allocation9], 0
    %15 = vsyncpa [#allocation4], 0
    // Predicated region
    $region2: #{net_forward.1} parent=1 // pred_check
      _
    $region3: #{net_forward.1} parent=1 // pred_check_branch
      %17 = sbr.rel (0) target = $region5
    $region4: #{net_forward.1} parent=1 // pred_region
      %s19 = ssub.s32 128, 128
      %20 = vsyncadd [#allocation3], %s19
      %s22 = sshll.u32 [#allocation2], 4
      %s23 = int_to_ptr.vmem [resolvable:$true] %s22
      %25 = dma.hbm_to_vmem [thread:$0]  %s0, 128, %s23, [#allocation3]
    $region5: #{net_forward.1} parent=1 // pred_fallthru
      _
    // Predicated region
    $region6: #{net_forward.1} parent=1 // pred_check
      _
    $region7: #{net_forward.1} parent=1 // pred_check_branch
      %27 = sbr.rel (0) target = $region9
    $region8: #{net_forward.1} parent=1 // pred_region
      %s29 = ssub.s32 512, 512
      %30 = vsyncadd [#allocation6], %s29
      %s31 = sshll.u32 [#allocation5], 4
      %s32 = int_to_ptr.vmem [resolvable:$true] %s31
      %37 = dma.hbm_to_vmem [thread:$0]  %s1, 512, %s32, [#allocation6], 128, 128, 8
    $region9: #{net_forward.1} parent=1 // pred_fallthru
      _
    // Predicated region
    $region10: #{net_forward.1} parent=1 // pred_check
      _
    $region11: #{net_forward.1} parent=1 // pred_check_branch
      %39 = sbr.rel (0) target = $region13
    $region12: #{net_forward.1} parent=1 // pred_region
      _
    $region13: #{net_forward.1} parent=1 // pred_fallthru
      _
    // Predicated region
    $region14: #{net_forward.1} parent=1 // pred_check
      _
    $region15: #{net_forward.1} parent=1 // pred_check_branch
      %41 = sbr.rel (0) target = $region17
    $region16: #{net_forward.1} parent=1 // pred_region
      %s43 = ssub.s32 2048, 2048
      %44 = vsyncadd [#allocation6], %s43
      %s45 = sshll.u32 [#allocation7], 4
      %s46 = int_to_ptr.vmem [resolvable:$true] %s45
      %51 = dma.hbm_to_vmem [thread:$0]  %s3, 2048, %s46, [#allocation6], 64, 64, 4
    $region17: #{net_forward.1} parent=1 // pred_fallthru
      _
    // Predicated region
    $region18: #{net_forward.1} parent=1 // pred_check
      _
    $region19: #{net_forward.1} parent=1 // pred_check_branch
      %53 = sbr.rel (0) target = $region21
    $region20: #{net_forward.1} parent=1 // pred_region
      _
    $region21: #{net_forward.1} parent=1 // pred_fallthru
      _
    // Predicated region
    $region22: #{net_forward.1} parent=1 // pred_check
      _
    $region23: #{net_forward.1} parent=1 // pred_check_branch
      %55 = sbr.rel (0) target = $region25
    $region24: #{net_forward.1} parent=1 // pred_region
      %s57 = ssub.s32 1024, 1024
      %58 = vsyncadd [#allocation9], %s57
      %s59 = sshll.u32 [#allocation8], 4
      %s60 = int_to_ptr.vmem [resolvable:$true] %s59
      %65 = dma.hbm_to_vmem [thread:$0]  %s5, 1024, %s60, [#allocation9], 64, 64, 4
    $region25: #{net_forward.1} parent=1 // pred_fallthru
      _
    // Predicated region
    $region26: #{net_forward.1} parent=1 // pred_check
      _
    $region27: #{net_forward.1} parent=1 // pred_check_branch
      %67 = sbr.rel (0) target = $region29
    $region28: #{net_forward.1} parent=1 // pred_region
      _
    $region29: #{net_forward.1} parent=1 // pred_fallthru
      _
    // Predicated region
    $region30: #{net_forward.1} parent=1 // pred_check
      _
    $region31: #{net_forward.1} parent=1 // pred_check_branch
      %69 = sbr.rel (0) target = $region33
    $region32: #{net_forward.1} parent=1 // pred_region
      %70 = dma.done [#allocation3], 128
    $region33: #{net_forward.1} parent=1 // pred_fallthru
      _
    // Predicated region
    $region34: #{net_forward.1} parent=1 // pred_check
      _
    $region35: #{net_forward.1} parent=1 // pred_check_branch
      %72 = sbr.rel (0) target = $region37
    $region36: #{net_forward.1} parent=1 // pred_region
      %73 = dma.done [#allocation6], 512
    $region37: #{net_forward.1} parent=1 // pred_fallthru
      _
    // Predicated region
    $region38: #{net_forward.1} parent=1 // pred_check
      _
    $region39: #{net_forward.1} parent=1 // pred_check_branch
      %75 = sbr.rel (0) target = $region41
    $region40: #{net_forward.1} parent=1 // pred_region
      %76 = dma.done [#allocation6], 2048
    $region41: #{net_forward.1} parent=1 // pred_fallthru
      _
    // Predicated region
    $region42: #{net_forward.1} parent=1 // pred_check
      _
    $region43: #{net_forward.1} parent=1 // pred_check_branch
      %78 = sbr.rel (0) target = $region45
    $region44: #{net_forward.1} parent=1 // pred_region
      %79 = dma.done [#allocation9], 1024
    $region45: #{net_forward.1} parent=1 // pred_fallthru
      _
    %v81 = vld [vmem:[#allocation2] sm:$0xff]
    %v82 = vpack.c.bf16 %v81, %v81
    %v83 = vld [vmem:[#allocation5] sm:$0xff]
    %v84 = vld [vmem:[#allocation5 + $0x8] sm:$0xff]
    %v85 = vld [vmem:[#allocation5 + $0x10] sm:$0xff]
    %v86 = vld [vmem:[#allocation5 + $0x18] sm:$0xff]
    %v87 = vld [vmem:[%s2] sm:$0x3]
    %v89 = vlaneseq
    %v90 = vshrl.u32 %v89, 7
    %v91 = vsub.s32 0, %v90
    %v92 = vrot.slane %v87, %v91
    %v93 = vlaneseq
    %v94 = vshrl.u32 %v93, 7
    %v95 = vsub.s32 1, %v94
    %v96 = vrot.slane %v87, %v95
    %v103 = vunpack.c.l.b16 %v83
    %v104 = vunpack.c.h.b16 %v83
    %v105 = vunpack.c.l.b16 %v84
    %v106 = vunpack.c.h.b16 %v84
    %v107 = vunpack.c.l.b16 %v85
    %v108 = vunpack.c.h.b16 %v85
    %v109 = vunpack.c.l.b16 %v86
    %v110 = vunpack.c.h.b16 %v86
    %v111 = vpack.c.b16 %v105, %v103
    %v112 = vpack.c.b16 %v106, %v104
    %v113 = vpack.c.b16 %v109, %v107
    %v114 = vpack.c.b16 %v110, %v108
    %vm119 = vcmask 261120
    %v121 = vsel %vm119, %v82, 0
    %123 = vmatprep.subr.bf16.mxu0 %v112
    %124 = vmatpush1.bf16.msra.mxu0 %v111
    %125 = vmatprep.subr.bf16.mxu0 %v114
    %126 = vmatpush1.bf16.msra.mxu0 %v113
    %127 = vmatprep.subr.bf16.mxu0 0
    %128 = vmatpush1.bf16.msra.mxu0 0
    %129 = vmatprep.subr.bf16.mxu0 0
    %130 = vmatpush1.bf16.msra.mxu0 0
    %131 = vmatprep.subr.bf16.mxu0 0
    %132 = vmatpush1.bf16.msra.mxu0 0
    %133 = vmatprep.subr.bf16.mxu0 0
    %134 = vmatpush1.bf16.msra.mxu0 0
    %135 = vmatprep.subr.bf16.mxu0 0
    %136 = vmatpush1.bf16.msra.mxu0 0
    %137 = vmatprep.subr.bf16.mxu0 0
    %138 = vmatpush1.bf16.msra.mxu0 0
    %139 = vmatprep.subr.bf16.mxu0 0
    %140 = vmatpush1.bf16.msra.mxu0 0
    %141 = vmatprep.subr.bf16.mxu0 0
    %142 = vmatpush1.bf16.msra.mxu0 0
    %143 = vmatprep.subr.bf16.mxu0 0
    %144 = vmatpush1.bf16.msra.mxu0 0
    %145 = vmatprep.subr.bf16.mxu0 0
    %146 = vmatpush1.bf16.msra.mxu0 0
    %147 = vmatprep.subr.bf16.mxu0 0
    %148 = vmatpush1.bf16.msra.mxu0 0
    %149 = vmatprep.subr.bf16.mxu0 0
    %150 = vmatpush1.bf16.msra.mxu0 0
    %151 = vmatprep.subr.bf16.mxu0 0
    %152 = vmatpush1.bf16.msra.mxu0 0
    %153 = vmatprep.subr.bf16.mxu0 0
    %154 = vmatpush1.bf16.msra.mxu0 0
    %155 = vmatprep.mubr.bf16.mxu0 0
    %156 = vmatmul.mubr.bf16.gmra.mrb[0].mxu0 %v121
    %v157 = vpop.f32.mrb[0].mxu0
    %v158 = vadd.f32 %v92, %v157
    %v159 = vpop.f32.mrb[0].mxu0
    %v160 = vadd.f32 %v96, %v159
    %v161 = vpop.f32.mrb[0].mxu0
    %v162 = vpop.f32.mrb[0].mxu0
    %163 = vdwg.mxu0
    %v164 = vmax.f32 %v158, 0.0
    %v165 = vmax.f32 %v160, 0.0
    %v166 = vpack.c.bf16 %v164, %v164
    %v167 = vpack.c.bf16 %v165, %v165
    %v168 = vld [vmem:[#allocation7] sm:$0xf]
    %v169 = vld [vmem:[#allocation7 + $0x4] sm:$0xf]
    %v170 = vld [vmem:[#allocation7 + $0x8] sm:$0xf]
    %v171 = vld [vmem:[#allocation7 + $0xc] sm:$0xf]
    %v172 = vld [vmem:[#allocation7 + $0x10] sm:$0xf]
    %v173 = vld [vmem:[#allocation7 + $0x14] sm:$0xf]
    %v174 = vld [vmem:[#allocation7 + $0x18] sm:$0xf]
    %v175 = vld [vmem:[#allocation7 + $0x1c] sm:$0xf]
    %v176 = vld [vmem:[#allocation7 + $0x20] sm:$0xf]
    %v177 = vld [vmem:[#allocation7 + $0x24] sm:$0xf]
    %v178 = vld [vmem:[#allocation7 + $0x28] sm:$0xf]
    %v179 = vld [vmem:[#allocation7 + $0x2c] sm:$0xf]
    %v180 = vld [vmem:[#allocation7 + $0x30] sm:$0xf]
    %v181 = vld [vmem:[#allocation7 + $0x34] sm:$0xf]
    %v182 = vld [vmem:[#allocation7 + $0x38] sm:$0xf]
    %v183 = vld [vmem:[#allocation7 + $0x3c] sm:$0xf]
    %v184 = vld [vmem:[#allocation7 + $0x40] sm:$0xf]
    %v185 = vld [vmem:[#allocation7 + $0x44] sm:$0xf]
    %v186 = vld [vmem:[#allocation7 + $0x48] sm:$0xf]
    %v187 = vld [vmem:[#allocation7 + $0x4c] sm:$0xf]
    %v188 = vld [vmem:[#allocation7 + $0x50] sm:$0xf]
    %v189 = vld [vmem:[#allocation7 + $0x54] sm:$0xf]
    %v190 = vld [vmem:[#allocation7 + $0x58] sm:$0xf]
    %v191 = vld [vmem:[#allocation7 + $0x5c] sm:$0xf]
    %v192 = vld [vmem:[#allocation7 + $0x60] sm:$0xf]
    %v193 = vld [vmem:[#allocation7 + $0x64] sm:$0xf]
    %v194 = vld [vmem:[#allocation7 + $0x68] sm:$0xf]
    %v195 = vld [vmem:[#allocation7 + $0x6c] sm:$0xf]
    %v196 = vld [vmem:[#allocation7 + $0x70] sm:$0xf]
    %v197 = vld [vmem:[#allocation7 + $0x74] sm:$0xf]
    %v198 = vld [vmem:[#allocation7 + $0x78] sm:$0xf]
    %v199 = vld [vmem:[#allocation7 + $0x7c] sm:$0xf]
    %v200 = vld [vmem:[%s4] sm:$0x1]
    %v202 = vlaneseq
    %v203 = vshrl.u32 %v202, 7
    %v204 = vsub.s32 0, %v203
    %v205 = vrot.slane %v200, %v204
    %v239 = vunpack.c.l.b16 %v168
    %v240 = vunpack.c.l.b16 %v169
    %v241 = vunpack.c.l.b16 %v170
    %v242 = vunpack.c.l.b16 %v171
    %v243 = vunpack.c.l.b16 %v172
    %v244 = vunpack.c.l.b16 %v173
    %v245 = vunpack.c.l.b16 %v174
    %v246 = vunpack.c.l.b16 %v175
    %v247 = vunpack.c.l.b16 %v176
    %v248 = vunpack.c.l.b16 %v177
    %v249 = vunpack.c.l.b16 %v178
    %v250 = vunpack.c.l.b16 %v179
    %v251 = vunpack.c.l.b16 %v180
    %v252 = vunpack.c.l.b16 %v181
    %v253 = vunpack.c.l.b16 %v182
    %v254 = vunpack.c.l.b16 %v183
    %v255 = vunpack.c.l.b16 %v184
    %v256 = vunpack.c.l.b16 %v185
    %v257 = vunpack.c.l.b16 %v186
    %v258 = vunpack.c.l.b16 %v187
    %v259 = vunpack.c.l.b16 %v188
    %v260 = vunpack.c.l.b16 %v189
    %v261 = vunpack.c.l.b16 %v190
    %v262 = vunpack.c.l.b16 %v191
    %v263 = vunpack.c.l.b16 %v192
    %v264 = vunpack.c.l.b16 %v193
    %v265 = vunpack.c.l.b16 %v194
    %v266 = vunpack.c.l.b16 %v195
    %v267 = vunpack.c.l.b16 %v196
    %v268 = vunpack.c.l.b16 %v197
    %v269 = vunpack.c.l.b16 %v198
    %v270 = vunpack.c.l.b16 %v199
    %v271 = vpack.c.b16 %v240, %v239
    %v272 = vpack.c.b16 %v242, %v241
    %v273 = vpack.c.b16 %v244, %v243
    %v274 = vpack.c.b16 %v246, %v245
    %v275 = vpack.c.b16 %v248, %v247
    %v276 = vpack.c.b16 %v250, %v249
    %v277 = vpack.c.b16 %v252, %v251
    %v278 = vpack.c.b16 %v254, %v253
    %v279 = vpack.c.b16 %v256, %v255
    %v280 = vpack.c.b16 %v258, %v257
    %v281 = vpack.c.b16 %v260, %v259
    %v282 = vpack.c.b16 %v262, %v261
    %v283 = vpack.c.b16 %v264, %v263
    %v284 = vpack.c.b16 %v266, %v265
    %v285 = vpack.c.b16 %v268, %v267
    %v286 = vpack.c.b16 %v270, %v269
    %303 = vmatprep.subr.bf16.mxu0 0
    %304 = vmatpush1.bf16.msra.mxu0 %v271
    %305 = vmatprep.subr.bf16.mxu0 0
    %306 = vmatpush1.bf16.msra.mxu0 %v272
    %307 = vmatprep.subr.bf16.mxu0 0
    %308 = vmatpush1.bf16.msra.mxu0 %v273
    %309 = vmatprep.subr.bf16.mxu0 0
    %310 = vmatpush1.bf16.msra.mxu0 %v274
    %311 = vmatprep.subr.bf16.mxu0 0
    %312 = vmatpush1.bf16.msra.mxu0 %v275
    %313 = vmatprep.subr.bf16.mxu0 0
    %314 = vmatpush1.bf16.msra.mxu0 %v276
    %315 = vmatprep.subr.bf16.mxu0 0
    %316 = vmatpush1.bf16.msra.mxu0 %v277
    %317 = vmatprep.subr.bf16.mxu0 0
    %318 = vmatpush1.bf16.msra.mxu0 %v278
    %319 = vmatprep.subr.bf16.mxu0 0
    %320 = vmatpush1.bf16.msra.mxu0 %v279
    %321 = vmatprep.subr.bf16.mxu0 0
    %322 = vmatpush1.bf16.msra.mxu0 %v280
    %323 = vmatprep.subr.bf16.mxu0 0
    %324 = vmatpush1.bf16.msra.mxu0 %v281
    %325 = vmatprep.subr.bf16.mxu0 0
    %326 = vmatpush1.bf16.msra.mxu0 %v282
    %327 = vmatprep.subr.bf16.mxu0 0
    %328 = vmatpush1.bf16.msra.mxu0 %v283
    %329 = vmatprep.subr.bf16.mxu0 0
    %330 = vmatpush1.bf16.msra.mxu0 %v284
    %331 = vmatprep.subr.bf16.mxu0 0
    %332 = vmatpush1.bf16.msra.mxu0 %v285
    %333 = vmatprep.subr.bf16.mxu0 0
    %334 = vmatpush1.bf16.msra.mxu0 %v286
    %335 = vmatprep.mubr.bf16.mxu0 %v167
    %336 = vmatmul.mubr.bf16.gmra.mrb[0].mxu0 %v166
    %v337 = vpop.f32.mrb[0].mxu0
    %v338 = vadd.f32 %v205, %v337
    %v339 = vpop.f32.mrb[0].mxu0
    %v340 = vpop.f32.mrb[0].mxu0
    %v341 = vpop.f32.mrb[0].mxu0
    %342 = vdwg.mxu0
    %v343 = vmax.f32 %v338, 0.0
    %v344 = vpack.c.bf16 %v343, %v343
    %v345 = vld [vmem:[#allocation8] sm:$0xf]
    %v346 = vld [vmem:[#allocation8 + $0x4] sm:$0xf]
    %v347 = vld [vmem:[#allocation8 + $0x8] sm:$0xf]
    %v348 = vld [vmem:[#allocation8 + $0xc] sm:$0xf]
    %v349 = vld [vmem:[#allocation8 + $0x10] sm:$0xf]
    %v350 = vld [vmem:[#allocation8 + $0x14] sm:$0xf]
    %v351 = vld [vmem:[#allocation8 + $0x18] sm:$0xf]
    %v352 = vld [vmem:[#allocation8 + $0x1c] sm:$0xf]
    %v353 = vld [vmem:[#allocation8 + $0x20] sm:$0xf]
    %v354 = vld [vmem:[#allocation8 + $0x24] sm:$0xf]
    %v355 = vld [vmem:[#allocation8 + $0x28] sm:$0xf]
    %v356 = vld [vmem:[#allocation8 + $0x2c] sm:$0xf]
    %v357 = vld [vmem:[#allocation8 + $0x30] sm:$0xf]
    %v358 = vld [vmem:[#allocation8 + $0x34] sm:$0xf]
    %v359 = vld [vmem:[#allocation8 + $0x38] sm:$0xf]
    %v360 = vld [vmem:[#allocation8 + $0x3c] sm:$0xf]
    %v361 = vld [vmem:[%s6] sm:$0x1]
    %v363 = vlaneseq
    %v364 = vshrl.u32 %v363, 7
    %v365 = vsub.s32 0, %v364
    %v366 = vrot.slane %v361, %v365
    %v384 = vunpack.c.l.b16 %v345
    %v385 = vunpack.c.l.b16 %v346
    %v386 = vunpack.c.l.b16 %v347
    %v387 = vunpack.c.l.b16 %v348
    %v388 = vunpack.c.l.b16 %v349
    %v389 = vunpack.c.l.b16 %v350
    %v390 = vunpack.c.l.b16 %v351
    %v391 = vunpack.c.l.b16 %v352
    %v392 = vunpack.c.l.b16 %v353
    %v393 = vunpack.c.l.b16 %v354
    %v394 = vunpack.c.l.b16 %v355
    %v395 = vunpack.c.l.b16 %v356
    %v396 = vunpack.c.l.b16 %v357
    %v397 = vunpack.c.l.b16 %v358
    %v398 = vunpack.c.l.b16 %v359
    %v399 = vunpack.c.l.b16 %v360
    %v400 = vpack.c.b16 %v385, %v384
    %v401 = vpack.c.b16 %v387, %v386
    %v402 = vpack.c.b16 %v389, %v388
    %v403 = vpack.c.b16 %v391, %v390
    %v404 = vpack.c.b16 %v393, %v392
    %v405 = vpack.c.b16 %v395, %v394
    %v406 = vpack.c.b16 %v397, %v396
    %v407 = vpack.c.b16 %v399, %v398
    %416 = vmatprep.subr.bf16.mxu0 0
    %417 = vmatpush1.bf16.msra.mxu0 %v400
    %418 = vmatprep.subr.bf16.mxu0 0
    %419 = vmatpush1.bf16.msra.mxu0 %v401
    %420 = vmatprep.subr.bf16.mxu0 0
    %421 = vmatpush1.bf16.msra.mxu0 %v402
    %422 = vmatprep.subr.bf16.mxu0 0
    %423 = vmatpush1.bf16.msra.mxu0 %v403
    %424 = vmatprep.subr.bf16.mxu0 0
    %425 = vmatpush1.bf16.msra.mxu0 %v404
    %426 = vmatprep.subr.bf16.mxu0 0
    %427 = vmatpush1.bf16.msra.mxu0 %v405
    %428 = vmatprep.subr.bf16.mxu0 0
    %429 = vmatpush1.bf16.msra.mxu0 %v406
    %430 = vmatprep.subr.bf16.mxu0 0
    %431 = vmatpush1.bf16.msra.mxu0 %v407
    %432 = vmatprep.subr.bf16.mxu0 0
    %433 = vmatpush1.bf16.msra.mxu0 0
    %434 = vmatprep.subr.bf16.mxu0 0
    %435 = vmatpush1.bf16.msra.mxu0 0
    %436 = vmatprep.subr.bf16.mxu0 0
    %437 = vmatpush1.bf16.msra.mxu0 0
    %438 = vmatprep.subr.bf16.mxu0 0
    %439 = vmatpush1.bf16.msra.mxu0 0
    %440 = vmatprep.subr.bf16.mxu0 0
    %441 = vmatpush1.bf16.msra.mxu0 0
    %442 = vmatprep.subr.bf16.mxu0 0
    %443 = vmatpush1.bf16.msra.mxu0 0
    %444 = vmatprep.subr.bf16.mxu0 0
    %445 = vmatpush1.bf16.msra.mxu0 0
    %446 = vmatprep.subr.bf16.mxu0 0
    %447 = vmatpush1.bf16.msra.mxu0 0
    %448 = vmatprep.mubr.bf16.mxu0 0
    %449 = vmatmul.mubr.bf16.gmra.mrb[0].mxu0 %v344
    %v450 = vpop.f32.mrb[0].mxu0
    %v451 = vadd.f32 %v366, %v450
    %v452 = vpop.f32.mrb[0].mxu0
    %v453 = vpop.f32.mrb[0].mxu0
    %v454 = vpop.f32.mrb[0].mxu0
    %455 = vdwg.mxu0
    %456 = vst [vmem:[#allocation10] sm:$0xff] %v451
    // Predicated region
    $region46: #{net_forward.1} parent=1 // pred_check
      _
    $region47: #{net_forward.1} parent=1 // pred_check_branch
      %458 = sbr.rel (0) target = $region49
    $region48: #{net_forward.1} parent=1 // pred_region
      %s460 = ssub.s32 128, 128
      %461 = vsyncadd [#allocation4], %s460
      %s463 = sshll.u32 [#allocation10], 4
      %s464 = int_to_ptr.vmem [resolvable:$true] %s463
      %466 = dma.vmem_to_hbm [thread:$0]  %s464, 128, %s7, [#allocation4]
    $region49: #{net_forward.1} parent=1 // pred_fallthru
      _
    // Predicated region
    $region50: #{net_forward.1} parent=1 // pred_check
      _
    $region51: #{net_forward.1} parent=1 // pred_check_branch
      %468 = sbr.rel (0) target = $region53
    $region52: #{net_forward.1} parent=1 // pred_region
      %469 = dma.done [#allocation4], 128
    $region53: #{net_forward.1} parent=1 // pred_fallthru
      _
    %470 = vsyncpa [#allocation3], 1
    %471 = vsyncpa [#allocation6], 1
    %472 = vsyncpa [#allocation9], 1
    %473 = vsyncpa [#allocation4], 1

</llo_original>
